<compile_context>
chip_gen: v7x
topology: tpu7x:2x2x1
jax: 0.10.0
libtpu: 0.0.40
codegen_flags: <defaults>
</compile_context>

<pallas_src>
import functools

import jax
import jax.numpy as jnp
from jax.experimental import pallas as pl
from jax.experimental.pallas import tpu as pltpu

_LANE = 128
_SUBLANE = 8


def _bert_avg_kernel(eps, h_ref, m_ref, o_ref):
    # h_ref: (bb, S, th)  hidden block (input dtype)
    # m_ref: (bb, 1, S)   fp32 mask block
    # o_ref: (bb, 1, th)  output block (input dtype)
    h = h_ref[...]
    m = m_ref[...]                                          # fp32 (bb, 1, S)
    # Masked sum over S on the MXU, fp32 accumulation.  precision=HIGHEST is
    # free here (HBM-bound) and restores near-exact f32 parity; the 0/1 mask
    # is exact in the hidden dtype, so the cast for the dot loses nothing.
    num = jnp.einsum(
        "bts,bsh->bth", m.astype(h.dtype), h,
        preferred_element_type=jnp.float32,
        precision=jax.lax.Precision.HIGHEST)                # (bb, 1, th) fp32
    # Denominator (token count) stays fp32, exact for any S.
    den = jnp.sum(m, axis=2, keepdims=True) + eps           # (bb, 1, 1)  fp32
    o_ref[...] = (num / den).astype(o_ref.dtype)


def _round_up(x, m):
    return -(-x // m) * m


def _vmem_capacity_bytes():
    """VMEM capacity for the current chip; conservative fallback if the query
    is unavailable (64 MiB == v7x per-TC VMEM, the smallest generation)."""
    try:
        cap = getattr(pltpu.get_tpu_info(), "vmem_capacity_bytes", None)
        if cap:
            return int(cap)
    except Exception:
        pass
    return 64 * 1024 * 1024


def _choose_tiles(B, S, H, itemsize, budget_bytes, min_steps=4):
    """Pick (bb, th) for a purely HBM-bound masked reduction.

    Priorities:
      1. Keep th == H (fully contiguous DMA rows); shrink bb to fit the
         per-buffer budget.
      2. Shrink bb further (never split H yet) until the grid has
         >= min_steps steps, so a 2-TC v7x chip gets >= 2 pipelined blocks
         per core and DMA/compute overlap exists.
      3. Split H only as a last resort (single (1,S,H) slab over budget, or
         B == 1), keeping th a lane-dense 128-multiple with >= ~1 KiB of
         contiguous bytes per row.
    """
    th = H
    divs = [d for d in range(B, 0, -1) if B % d == 0]       # descending

    # 1) Largest batch tile whose hidden slab fits the per-buffer budget.
    bb = 1
    for d in divs:
        if d * S * th * itemsize <= budget_bytes:
            bb = d
            break

    # 2) Shrink bb toward 1 until the grid reaches min_steps.
    if (B // bb) * (H // th) < min_steps:
        for d in divs:
            if d < bb:
                bb = d
                if (B // bb) * (H // th) >= min_steps:
                    break

    # 3) Last-resort H split (budget blown at bb==1, or still too few steps),
    #    with a contiguity floor of ~1 KiB per DMA row.
    if H % _LANE == 0:
        min_th = _round_up(max(_LANE, (1024 + itemsize - 1) // itemsize), _LANE)
        while (th % 2 == 0
               and (th // 2) >= min_th
               and (th // 2) % _LANE == 0
               and (bb * S * th * itemsize > budget_bytes
                    or (B // bb) * (H // th) < min_steps)):
            th //= 2
    # else: th stays H; the wrapper sizes vmem_limit_bytes to cover the block.

    return bb, th


def bert_avg(hidden_states: jax.Array, attention_mask: jax.Array,
             eps: float = 1e-12) -> jax.Array:
    """Masked average pooling: sum_s(h * m) / (sum_s(m) + eps)."""
    B, S, H = hidden_states.shape
    if attention_mask.shape != (B, S):
        raise ValueError(
            f"attention_mask must have shape {(B, S)}, got "
            f"{attention_mask.shape}; (B,1,1,S) / additive masks are not supported.")

    itemsize = hidden_states.dtype.itemsize
    vmem_cap = _vmem_capacity_bytes()
    budget = min(12 << 20, vmem_cap // 5)
    bb, th = _choose_tiles(B, S, H, itemsize, budget)

    # Ship the mask as fp32 with S on lanes (no lane-width-1 (B, S, 1) array).
    mask3 = attention_mask.reshape(B, 1, S).astype(jnp.float32)

    # VMEM limit from actual (padded, double-buffered) block footprints.
    hidden_bytes = bb * _round_up(S, _SUBLANE) * _round_up(th, _LANE) * itemsize
    mask_bytes = bb * _SUBLANE * _round_up(S, _LANE) * 4
    out_bytes = bb * _SUBLANE * _round_up(th, _LANE) * itemsize
    required = 2 * (hidden_bytes + mask_bytes + out_bytes) + (2 << 20)
    vmem_limit = int(max(required, min(32 << 20, (vmem_cap * 3) // 4)))

    out = pl.pallas_call(
        functools.partial(_bert_avg_kernel, eps),
        out_shape=jax.ShapeDtypeStruct((B, 1, H), hidden_states.dtype),
        grid_spec=pltpu.PrefetchScalarGridSpec(
            num_scalar_prefetch=0,
            grid=(B // bb, H // th),
            in_specs=[
                # hidden_states: batch-packed slab, contiguous rows when th == H.
                pl.BlockSpec((bb, S, th), lambda b, j: (b, 0, j)),
                # mask: same batch block for every H tile (tiny, cheap re-fetch).
                pl.BlockSpec((bb, 1, S), lambda b, j: (b, 0, 0)),
            ],
            out_specs=pl.BlockSpec((bb, 1, th), lambda b, j: (b, 0, j)),
        ),
        compiler_params=pltpu.CompilerParams(
            dimension_semantics=("parallel", "parallel"),
            vmem_limit_bytes=vmem_limit,
        ),
    )(hidden_states, mask3)
    return out.reshape(B, H)


if __name__ == "__main__":
    key = jax.random.PRNGKey(0)
    k_h, k_m = jax.random.split(key)

    B, S, H = 2, 8, 32
    hidden_states = jax.random.normal(k_h, (B, S, H), dtype=jnp.float32)
    # Binary attention mask with some padding positions zeroed out.
    attention_mask = (jax.random.uniform(k_m, (B, S)) > 0.3).astype(jnp.float32)

    out = bert_avg(hidden_states, attention_mask)
    out = jax.block_until_ready(out)

    # Pure-JAX reference (same math as the PyTorch forward).
    ref = (jnp.sum(hidden_states * attention_mask[:, :, None], axis=1)
           / (jnp.sum(attention_mask, axis=1, keepdims=True) + 1e-12))
    assert out.shape == (B, H)
    assert jnp.allclose(out, ref, atol=1e-5, rtol=1e-5)

    print("KERNEL_OK")
</pallas_src>

<mosaic_0001>
module attributes {stable_mosaic.version = 11 : i64} {
  func.func @_bert_avg_kernel(%arg0: i32, %arg1: i32, %arg2: memref<1x8x32xf32, #tpu.memory_space<vmem>>, %arg3: memref<1x1x8xf32, #tpu.memory_space<vmem>>, %arg4: memref<1x1x32xf32, #tpu.memory_space<vmem>>) attributes {dimension_semantics = [#tpu.dimension_semantics<parallel>, #tpu.dimension_semantics<parallel>], iteration_bounds = array<i64: 2, 1>, scalar_prefetch = 0 : i64, scratch_operands = 0 : i64, tpu.core_type = #tpu.core_type<tc>, window_params = [{transform_indices = @transform_0, window_bounds = array<i64: 1, 8, 32>}, {transform_indices = @transform_1, window_bounds = array<i64: 1, 1, 8>}, {transform_indices = @transform_2, window_bounds = array<i64: 1, 1, 32>}]} {
    %c0 = arith.constant 0 : index
    %c0_0 = arith.constant 0 : index
    %c0_1 = arith.constant 0 : index
    %0 = vector.load %arg2[%c0, %c0_0, %c0_1] : memref<1x8x32xf32, #tpu.memory_space<vmem>>, vector<1x8x32xf32>
    %c0_2 = arith.constant 0 : index
    %c0_3 = arith.constant 0 : index
    %c0_4 = arith.constant 0 : index
    %1 = vector.load %arg3[%c0_2, %c0_3, %c0_4] : memref<1x1x8xf32, #tpu.memory_space<vmem>>, vector<1x1x8xf32>
    "tpu.trace_start"() <{level = 10 : i32, message = "bts,bsh->bth"}> : () -> ()
    %cst = arith.constant dense<0.000000e+00> : vector<1x1x32xf32>
    %2 = tpu.matmul %1, %0, %cst {dimension_numbers = #tpu.dot_dimension_numbers<[2], [1], [1], [2], [0, 0, 0, 1, 1, 2], [0], [0]>, precision = #tpu.contract_precision<fp32>} : vector<1x1x8xf32>, vector<1x8x32xf32>, vector<1x1x32xf32> -> vector<1x1x32xf32>
    "tpu.trace_stop"() : () -> ()
    %cst_5 = arith.constant dense<0.000000e+00> : vector<1x1xf32>
    %3 = vector.multi_reduction <add>, %1, %cst_5 [2] : vector<1x1x8xf32> to vector<1x1xf32>
    %4 = vector.shape_cast %3 : vector<1x1xf32> to vector<1x1x1xf32>
    %cst_6 = arith.constant 9.99999996E-13 : f32
    %5 = vector.broadcast %cst_6 : f32 to vector<1x1x1xf32>
    %6 = arith.addf %4, %5 : vector<1x1x1xf32>
    %7 = vector.broadcast %6 : vector<1x1x1xf32> to vector<1x1x32xf32>
    %8 = arith.divf %2, %7 : vector<1x1x32xf32>
    %c0_7 = arith.constant 0 : index
    %c0_8 = arith.constant 0 : index
    %c0_9 = arith.constant 0 : index
    %9 = vector.load %arg4[%c0_7, %c0_8, %c0_9] : memref<1x1x32xf32, #tpu.memory_space<vmem>>, vector<1x1x32xf32>
    tpu.vector_store %arg4[%c0_7, %c0_8, %c0_9], %8 {strides = array<i32>} : memref<1x1x32xf32, #tpu.memory_space<vmem>>, vector<1x1x32xf32>,
    return
  }
  func.func @transform_0(%arg0: i32, %arg1: i32) -> (i32, i32, i32) {
    %c0_i32 = arith.constant 0 : i32
    %c0_i32_0 = arith.constant 0 : i32
    return %arg0, %c0_i32, %arg1 : i32, i32, i32
  }
  func.func @transform_1(%arg0: i32, %arg1: i32) -> (i32, i32, i32) {
    %c0_i32 = arith.constant 0 : i32
    %c0_i32_0 = arith.constant 0 : i32
    %c0_i32_1 = arith.constant 0 : i32
    return %arg0, %c0_i32, %c0_i32_0 : i32, i32, i32
  }
  func.func @transform_2(%arg0: i32, %arg1: i32) -> (i32, i32, i32) {
    %c0_i32 = arith.constant 0 : i32
    %c0_i32_0 = arith.constant 0 : i32
    return %arg0, %c0_i32, %arg1 : i32, i32, i32
  }
}

</mosaic_0001>

<llo_original>
// kernel: tpu_custom_call.1
$region0: #{tpu_custom_call.1}
  #allocation0 [shape = 'u32[]', space=smem, size = 0x4, offset = 0x4, fixed_abs, tag = 'smem constant byte address 0x4 - core index']
  #allocation1 [shape = 'u32[144,128]{1,0:T(1,128)}', space=vmem, size = 0x12000, scoped, tag = 'internal scratch']
  %s0 = inlined_call_operand.hbm [shape: f32[2,8,32], index: 0, kind: input, shape index: {}]
  %s1 = inlined_call_operand.vmem [shape: f32[2,1,8], index: 1, kind: input, shape index: {}]
  %s2 = inlined_call_operand.hbm [shape: f32[2,1,32], index: 2, kind: output, shape index: {}]
  %s3 = sld [smem:[#allocation0]]
  $region45: #{tpu_custom_call.1} parent=0
    _
  %s5 = ssub.s32 1, %s3
  %s6 = scalar_select 0, %s5, %s3
  $region1: #{tpu_custom_call.1} parent=0
    #allocation2 [shape = 'u8[8192]{0}', space=vmem, size = 0x2000, scoped, tag = 'input window, operand 0']
    #allocation3 [shape = 's32[2]{0}', space=sflag, size = 0x8, scoped, tag = 'scoped memory for tpu_custom_call.1']
    #allocation4 [shape = 's32[2]{0}', space=sflag, size = 0x8, scoped, tag = 'scoped memory for tpu_custom_call.1']
    #allocation5 [shape = 'u8[1024]{0}', space=vmem, size = 0x400, scoped, tag = 'output window, operand 0']
    %7 = vsyncpa [#allocation3], 0
    %s8 = scalar_lea.sflag [#allocation3], 1
    %9 = vsyncpa %s8, 0
    %10 = vsyncpa [#allocation4], 0
    %s11 = scalar_lea.sflag [#allocation4], 1
    %12 = vsyncpa %s11, 0
    loop: start=0, step=1, limit=4
    $region2: #{tpu_custom_call.1} parent=1 // loop_pre_header
      _
    $region3: #{tpu_custom_call.1} parent=1 // loop_header
      %s14 = sphi 0, %s18
      %p15 = scmp.ge.s32.totalorder %s14, 4
      %s21 = sphi 0, %s33
      %s22 = sphi 0, %s29
      %s23 = sphi 0, %s21
      %s24 = sphi 0, %s22
      %s25 = sphi 0, %s23
      %s26 = sphi 0, %s24
      %s38 = sphi 0, %s40
      %s41 = sphi 0, %s38
      %s42 = sphi 0, %s41
      %s58 = sphi 0, %s42
      %s64 = sphi 0, %s66
      %s67 = sphi 0, %s64
      %s68 = sphi 0, %s67
      %s84 = sphi 0, %s68
      %s92 = sphi 0, %s94
      %s95 = sphi 0, %s92
      %s96 = sphi 0, %s95
      %s112 = sphi 0, %s96
    $region4: #{tpu_custom_call.1} parent=1 // loop_header_branch
      %17 = sbr.rel (%p15) target = $region8
    $region5: #{tpu_custom_call.1} parent=1 // loop_body
      %s19 = ssub.s32 %s14, 1
      %s20 = ssub.s32 %s14, 2
      %s27 = sadd.s32 1, %s22
      %p28 = scmp.ge.s32.totalorder %s27, 1
      %s29 = scalar_select %p28, 0, %s27
      %s30 = sadd.s32 1, %s21
      %s31 = scalar_select %p28, %s30, %s21
      %p32 = scmp.ge.s32.totalorder %s31, 2
      %s33 = scalar_select %p32, 0, %s31
      %s34 = ssub.s32 %s21, %s33
      %s35 = ssub.s32 %s22, %s29
      %s36 = sor.u32 %s34, %s35
      %p37 = scmp.eq.s32.totalorder %s36, 0
      %s39 = sadd.s32 %s38, 1
      %s40 = scalar_select %p37, %s38, %s39
      %p43 = pneg %p37
      %p44 = scmp.eq.s32.totalorder %s14, 1
      %p45 = por %p43, %p44
      %p46 = scmp.ne.s32.totalorder %s38, %s41
      %p47 = scmp.eq.s32.totalorder %s14, 0
      %p48 = por %p46, %p47
      %p49 = scmp.ne.s32.totalorder %s38, %s41
      %p50 = scmp.eq.s32.totalorder %s19, 1
      %p51 = por %p49, %p50
      %p52 = scmp.ne.s32.totalorder %s41, %s42
      %p53 = scmp.eq.s32.totalorder %s19, 0
      %p54 = por %p52, %p53
      %p55 = scmp.ne.s32.totalorder %s41, %s42
      %p56 = scmp.eq.s32.totalorder %s20, 1
      %p57 = por %p55, %p56
      %p59 = scmp.ne.s32.totalorder %s42, %s58
      %p60 = scmp.eq.s32.totalorder %s20, 0
      %p61 = por %p59, %p60
      %s62 = ssub.s32 %s21, %s33
      %p63 = scmp.eq.s32.totalorder %s62, 0
      %s65 = sadd.s32 %s64, 1
      %s66 = scalar_select %p63, %s64, %s65
      %p69 = pneg %p63
      %p70 = scmp.eq.s32.totalorder %s14, 1
      %p71 = por %p69, %p70
      %p72 = scmp.ne.s32.totalorder %s64, %s67
      %p73 = scmp.eq.s32.totalorder %s14, 0
      %p74 = por %p72, %p73
      %p75 = scmp.ne.s32.totalorder %s64, %s67
      %p76 = scmp.eq.s32.totalorder %s19, 1
      %p77 = por %p75, %p76
      %p78 = scmp.ne.s32.totalorder %s67, %s68
      %p79 = scmp.eq.s32.totalorder %s19, 0
      %p80 = por %p78, %p79
      %p81 = scmp.ne.s32.totalorder %s67, %s68
      %p82 = scmp.eq.s32.totalorder %s20, 1
      %p83 = por %p81, %p82
      %p85 = scmp.ne.s32.totalorder %s68, %s84
      %p86 = scmp.eq.s32.totalorder %s20, 0
      %p87 = por %p85, %p86
      %s88 = ssub.s32 %s21, %s33
      %s89 = ssub.s32 %s22, %s29
      %s90 = sor.u32 %s88, %s89
      %p91 = scmp.eq.s32.totalorder %s90, 0
      %s93 = sadd.s32 %s92, 1
      %s94 = scalar_select %p91, %s92, %s93
      %p97 = pneg %p91
      %p98 = scmp.eq.s32.totalorder %s14, 1
      %p99 = por %p97, %p98
      %p100 = scmp.ne.s32.totalorder %s92, %s95
      %p101 = scmp.eq.s32.totalorder %s14, 0
      %p102 = por %p100, %p101
      %p103 = scmp.ne.s32.totalorder %s92, %s95
      %p104 = scmp.eq.s32.totalorder %s19, 1
      %p105 = por %p103, %p104
      %p106 = scmp.ne.s32.totalorder %s95, %s96
      %p107 = scmp.eq.s32.totalorder %s19, 0
      %p108 = por %p106, %p107
      %p109 = scmp.ne.s32.totalorder %s95, %s96
      %p110 = scmp.eq.s32.totalorder %s20, 1
      %p111 = por %p109, %p110
      %p113 = scmp.ne.s32.totalorder %s96, %s112
      %p114 = scmp.eq.s32.totalorder %s20, 0
      %p115 = por %p113, %p114
      %p116 = scmp.le.s32.totalorder 1, %s14
      %p117 = scmp.lt.s32.totalorder %s14, 3
      %p118 = pnand %p116, %p117
      %p119 = pneg %p118
      // Predicated region
      $region9: #{tpu_custom_call.1} parent=5 // pred_check
        _
      $region10: #{tpu_custom_call.1} parent=5 // pred_check_branch
        %121 = sbr.rel (%p118) target = $region12
      $region11: #{tpu_custom_call.1} parent=5 // pred_region
        %s122 = ssub.s32 %s14, 1
      $region12: #{tpu_custom_call.1} parent=5 // pred_fallthru
        _
      %p123 = scmp.lt.s32.totalorder %s14, 2
      // Predicated region
      $region13: #{tpu_custom_call.1} parent=5 // pred_check
        %p124 = pneg %p123
      $region14: #{tpu_custom_call.1} parent=5 // pred_check_branch
        %126 = sbr.rel (%p124) target = $region16
      $region15: #{tpu_custom_call.1} parent=5 // pred_region
        // Predicated region
        $region17: #{tpu_custom_call.1} parent=15 // pred_check
          %p127 = pneg %p48
        $region18: #{tpu_custom_call.1} parent=15 // pred_check_branch
          %129 = sbr.rel (%p127) target = $region20
        $region19: #{tpu_custom_call.1} parent=15 // pred_region
          %s130 = sand.u32 %s38, 1
          %s131 = scalar_lea.sflag [#allocation3], %s130
          %s132 = sand.u32 %s38, 1
          %s133 = smul.addr %s132, 8
          %s134 = scalar_lea.vmem [#allocation2], %s133
          %s136 = ssub.s32 128, 128
          %137 = vsyncadd %s131, %s136
          %s138 = sadd.s32 %s22, %s21
          %s139 = smul.addr %s138, 128
          %s140 = scalar_lea.hbm %s0, %s139
          %s142 = sshll.u32 %s134, 4
          %s143 = int_to_ptr.vmem [resolvable:$true] %s142
          %145 = dma.hbm_to_vmem [thread:$0]  %s140, 128, %s143, %s131
        $region20: #{tpu_custom_call.1} parent=15 // pred_fallthru
          _
        // Predicated region
        $region21: #{tpu_custom_call.1} parent=15 // pred_check
          %p146 = pneg %p74
        $region22: #{tpu_custom_call.1} parent=15 // pred_check_branch
          %148 = sbr.rel (%p146) target = $region24
        $region23: #{tpu_custom_call.1} parent=15 // pred_region
          %p149 = scmp.lt.s32.totalorder %s21, 1
          %s150 = scalar_select %p149, %s21, 1
          %s151 = scalar_lea.vmem %s1, %s150
        $region24: #{tpu_custom_call.1} parent=15 // pred_fallthru
          _
      $region16: #{tpu_custom_call.1} parent=5 // pred_fallthru
        _
      %p152 = scmp.le.s32.totalorder 1, %s14
      %p153 = scmp.lt.s32.totalorder %s14, 3
      %p154 = pnand %p152, %p153
      %p155 = pneg %p154
      // Predicated region
      $region25: #{tpu_custom_call.1} parent=5 // pred_check
        _
      $region26: #{tpu_custom_call.1} parent=5 // pred_check_branch
        %157 = sbr.rel (%p154) target = $region28
      $region27: #{tpu_custom_call.1} parent=5 // pred_region
        %s158 = ssub.s32 %s14, 1
        %s159 = sand.u32 %s41, 1
        %s160 = scalar_lea.sflag [#allocation3], %s159
        %s161 = sand.u32 %s41, 1
        %s162 = smul.addr %s161, 8
        %s163 = scalar_lea.vmem [#allocation2], %s162
        // Predicated region
        $region29: #{tpu_custom_call.1} parent=27 // pred_check
          %p164 = pneg %p54
        $region30: #{tpu_custom_call.1} parent=27 // pred_check_branch
          %166 = sbr.rel (%p164) target = $region32
        $region31: #{tpu_custom_call.1} parent=27 // pred_region
          %167 = dma.done %s160, 128
        $region32: #{tpu_custom_call.1} parent=27 // pred_fallthru
          _
        %s168 = sand.u32 %s41, 1
        %s169 = scalar_lea.sflag [#allocation3], %s168
        %s170 = sand.u32 %s41, 1
        %s171 = smul.addr %s170, 8
        %s172 = scalar_lea.vmem [#allocation2], %s171
        %p173 = pneg %p54
        %p174 = pneg %p51
        %p175 = scmp.lt.s32.totalorder %s23, 1
        %s176 = scalar_select %p175, %s23, 1
        %s177 = scalar_lea.vmem %s1, %s176
        %p178 = pneg %p80
        %p179 = pneg %p77
        %p180 = pneg %p108
        %p181 = pneg %p105
        %s182 = sand.u32 %s95, 1
        %s183 = scalar_lea.sflag [#allocation4], %s182
        %s184 = sand.u32 %s95, 1
        %s185 = scalar_lea.vmem [#allocation5], %s184
        %p186 = scmp.lt.s32.totalorder %s23, 1
        %s187 = scalar_select %p186, %s23, 1
        %s188 = scalar_lea.vmem %s1, %s187
        %v189 = vld [vmem:[%s163] sm:$0xff]
        %v190 = vld [vmem:[%s188] sm:$0x1]
        %vm191 = vcmask 64512
        %v193 = vsel %vm191, %v190, 0
        %195 = vmatprep.subr.mxu0 0.0
        %v196 = vand.u32 %v189, 4294901760
        %197 = vmatpush1.msra.mxu0 %v196
        %198 = vmatprep.subr.mxu0 0.0
        %199 = vmatpush1.msra.mxu0 0.0
        %200 = vmatprep.subr.mxu0 0.0
        %201 = vmatpush1.msra.mxu0 0.0
        %202 = vmatprep.subr.mxu0 0.0
        %203 = vmatpush1.msra.mxu0 0.0
        %204 = vmatprep.subr.mxu0 0.0
        %205 = vmatpush1.msra.mxu0 0.0
        %206 = vmatprep.subr.mxu0 0.0
        %207 = vmatpush1.msra.mxu0 0.0
        %208 = vmatprep.subr.mxu0 0.0
        %209 = vmatpush1.msra.mxu0 0.0
        %210 = vmatprep.subr.mxu0 0.0
        %211 = vmatpush1.msra.mxu0 0.0
        %212 = vmatprep.subr.mxu0 0.0
        %213 = vmatpush1.msra.mxu0 0.0
        %214 = vmatprep.subr.mxu0 0.0
        %215 = vmatpush1.msra.mxu0 0.0
        %216 = vmatprep.subr.mxu0 0.0
        %217 = vmatpush1.msra.mxu0 0.0
        %218 = vmatprep.subr.mxu0 0.0
        %219 = vmatpush1.msra.mxu0 0.0
        %220 = vmatprep.subr.mxu0 0.0
        %221 = vmatpush1.msra.mxu0 0.0
        %222 = vmatprep.subr.mxu0 0.0
        %223 = vmatpush1.msra.mxu0 0.0
        %224 = vmatprep.subr.mxu0 0.0
        %225 = vmatpush1.msra.mxu0 0.0
        %226 = vmatprep.subr.mxu0 0.0
        %227 = vmatpush1.msra.mxu0 0.0
        %228 = vmatprep.subr.mxu0 0.0
        %229 = vmatpush1.msra.mxu0 0.0
        %230 = vmatprep.subr.mxu0 0.0
        %231 = vmatpush1.msra.mxu0 0.0
        %232 = vmatprep.subr.mxu0 0.0
        %233 = vmatpush1.msra.mxu0 0.0
        %234 = vmatprep.subr.mxu0 0.0
        %235 = vmatpush1.msra.mxu0 0.0
        %236 = vmatprep.subr.mxu0 0.0
        %237 = vmatpush1.msra.mxu0 0.0
        %238 = vmatprep.subr.mxu0 0.0
        %239 = vmatpush1.msra.mxu0 0.0
        %240 = vmatprep.subr.mxu0 0.0
        %241 = vmatpush1.msra.mxu0 0.0
        %242 = vmatprep.subr.mxu0 0.0
        %243 = vmatpush1.msra.mxu0 0.0
        %244 = vmatprep.subr.mxu0 0.0
        %245 = vmatpush1.msra.mxu0 0.0
        %246 = vmatprep.subr.mxu0 0.0
        %247 = vmatpush1.msra.mxu0 0.0
        %248 = vmatprep.subr.mxu0 0.0
        %249 = vmatpush1.msra.mxu0 0.0
        %250 = vmatprep.subr.mxu0 0.0
        %251 = vmatpush1.msra.mxu0 0.0
        %252 = vmatprep.subr.mxu0 0.0
        %253 = vmatpush1.msra.mxu0 0.0
        %254 = vmatprep.subr.mxu0 0.0
        %255 = vmatpush1.msra.mxu0 0.0
        %256 = vmatprep.subr.mxu0 0.0
        %257 = vmatpush1.msra.mxu0 0.0
        %258 = vmatprep.subr.mxu0 0.0
        %259 = vmatpush1.msra.mxu0 0.0
        %260 = vmatprep.mubr.f32.mxu0 0.0
        %v261 = vand.u32 %v193, 4294901760
        %v262 = vsub.f32 %v193, %v261
        %v263 = vand.u32 %v262, 4294901760
        %v264 = vsub.f32 %v262, %v263
        %v265 = vand.u32 %v264, 4294901760
        %266 = vmatmul.mubr.f32.gmra.mrb[0].mxu0 %v265
        %v267 = vpop.f32.mrb[0].mxu0
        %v268 = vadd.f32 0.0, %v267
        %v269 = vpop.f32.mrb[0].mxu0
        %270 = vdwg.mxu0
        %271 = vmatprep.subr.mxu0 0.0
        %v272 = vand.u32 %v189, 4294901760
        %v273 = vsub.f32 %v189, %v272
        %v274 = vand.u32 %v273, 4294901760
        %v275 = vsub.f32 %v273, %v274
        %v276 = vand.u32 %v275, 4294901760
        %277 = vmatpush1.msra.mxu0 %v276
        %278 = vmatprep.subr.mxu0 0.0
        %279 = vmatpush1.msra.mxu0 0.0
        %280 = vmatprep.subr.mxu0 0.0
        %281 = vmatpush1.msra.mxu0 0.0
        %282 = vmatprep.subr.mxu0 0.0
        %283 = vmatpush1.msra.mxu0 0.0
        %284 = vmatprep.subr.mxu0 0.0
        %285 = vmatpush1.msra.mxu0 0.0
        %286 = vmatprep.subr.mxu0 0.0
        %287 = vmatpush1.msra.mxu0 0.0
        %288 = vmatprep.subr.mxu0 0.0
        %289 = vmatpush1.msra.mxu0 0.0
        %290 = vmatprep.subr.mxu0 0.0
        %291 = vmatpush1.msra.mxu0 0.0
        %292 = vmatprep.subr.mxu0 0.0
        %293 = vmatpush1.msra.mxu0 0.0
        %294 = vmatprep.subr.mxu0 0.0
        %295 = vmatpush1.msra.mxu0 0.0
        %296 = vmatprep.subr.mxu0 0.0
        %297 = vmatpush1.msra.mxu0 0.0
        %298 = vmatprep.subr.mxu0 0.0
        %299 = vmatpush1.msra.mxu0 0.0
        %300 = vmatprep.subr.mxu0 0.0
        %301 = vmatpush1.msra.mxu0 0.0
        %302 = vmatprep.subr.mxu0 0.0
        %303 = vmatpush1.msra.mxu0 0.0
        %304 = vmatprep.subr.mxu0 0.0
        %305 = vmatpush1.msra.mxu0 0.0
        %306 = vmatprep.subr.mxu0 0.0
        %307 = vmatpush1.msra.mxu0 0.0
        %308 = vmatprep.subr.mxu0 0.0
        %309 = vmatpush1.msra.mxu0 0.0
        %310 = vmatprep.subr.mxu0 0.0
        %311 = vmatpush1.msra.mxu0 0.0
        %312 = vmatprep.subr.mxu0 0.0
        %313 = vmatpush1.msra.mxu0 0.0
        %314 = vmatprep.subr.mxu0 0.0
        %315 = vmatpush1.msra.mxu0 0.0
        %316 = vmatprep.subr.mxu0 0.0
        %317 = vmatpush1.msra.mxu0 0.0
        %318 = vmatprep.subr.mxu0 0.0
        %319 = vmatpush1.msra.mxu0 0.0
        %320 = vmatprep.subr.mxu0 0.0
        %321 = vmatpush1.msra.mxu0 0.0
        %322 = vmatprep.subr.mxu0 0.0
        %323 = vmatpush1.msra.mxu0 0.0
        %324 = vmatprep.subr.mxu0 0.0
        %325 = vmatpush1.msra.mxu0 0.0
        %326 = vmatprep.subr.mxu0 0.0
        %327 = vmatpush1.msra.mxu0 0.0
        %328 = vmatprep.subr.mxu0 0.0
        %329 = vmatpush1.msra.mxu0 0.0
        %330 = vmatprep.subr.mxu0 0.0
        %331 = vmatpush1.msra.mxu0 0.0
        %332 = vmatprep.subr.mxu0 0.0
        %333 = vmatpush1.msra.mxu0 0.0
        %334 = vmatprep.subr.mxu0 0.0
        %335 = vmatpush1.msra.mxu0 0.0
        %336 = vmatprep.subr.mxu0 0.0
        %337 = vmatpush1.msra.mxu0 0.0
        %338 = vmatprep.subr.mxu0 0.0
        %339 = vmatpush1.msra.mxu0 0.0
        %340 = vmatprep.mubr.f32.mxu0 0.0
        %v341 = vand.u32 %v193, 4294901760
        %342 = vmatmul.mubr.f32.gmra.mrb[0].mxu0 %v341
        %v343 = vpop.f32.mrb[0].mxu0
        %v344 = vadd.f32 %v268, %v343
        %v345 = vpop.f32.mrb[0].mxu0
        %346 = vdwg.mxu0
        %347 = vmatprep.subr.mxu0 0.0
        %v348 = vand.u32 %v189, 4294901760
        %v349 = vsub.f32 %v189, %v348
        %350 = vmatpush1.msra.mxu0 %v349
        %351 = vmatprep.subr.mxu0 0.0
        %352 = vmatpush1.msra.mxu0 0.0
        %353 = vmatprep.subr.mxu0 0.0
        %354 = vmatpush1.msra.mxu0 0.0
        %355 = vmatprep.subr.mxu0 0.0
        %356 = vmatpush1.msra.mxu0 0.0
        %357 = vmatprep.subr.mxu0 0.0
        %358 = vmatpush1.msra.mxu0 0.0
        %359 = vmatprep.subr.mxu0 0.0
        %360 = vmatpush1.msra.mxu0 0.0
        %361 = vmatprep.subr.mxu0 0.0
        %362 = vmatpush1.msra.mxu0 0.0
        %363 = vmatprep.subr.mxu0 0.0
        %364 = vmatpush1.msra.mxu0 0.0
        %365 = vmatprep.subr.mxu0 0.0
        %366 = vmatpush1.msra.mxu0 0.0
        %367 = vmatprep.subr.mxu0 0.0
        %368 = vmatpush1.msra.mxu0 0.0
        %369 = vmatprep.subr.mxu0 0.0
        %370 = vmatpush1.msra.mxu0 0.0
        %371 = vmatprep.subr.mxu0 0.0
        %372 = vmatpush1.msra.mxu0 0.0
        %373 = vmatprep.subr.mxu0 0.0
        %374 = vmatpush1.msra.mxu0 0.0
        %375 = vmatprep.subr.mxu0 0.0
        %376 = vmatpush1.msra.mxu0 0.0
        %377 = vmatprep.subr.mxu0 0.0
        %378 = vmatpush1.msra.mxu0 0.0
        %379 = vmatprep.subr.mxu0 0.0
        %380 = vmatpush1.msra.mxu0 0.0
        %381 = vmatprep.subr.mxu0 0.0
        %382 = vmatpush1.msra.mxu0 0.0
        %383 = vmatprep.subr.mxu0 0.0
        %384 = vmatpush1.msra.mxu0 0.0
        %385 = vmatprep.subr.mxu0 0.0
        %386 = vmatpush1.msra.mxu0 0.0
        %387 = vmatprep.subr.mxu0 0.0
        %388 = vmatpush1.msra.mxu0 0.0
        %389 = vmatprep.subr.mxu0 0.0
        %390 = vmatpush1.msra.mxu0 0.0
        %391 = vmatprep.subr.mxu0 0.0
        %392 = vmatpush1.msra.mxu0 0.0
        %393 = vmatprep.subr.mxu0 0.0
        %394 = vmatpush1.msra.mxu0 0.0
        %395 = vmatprep.subr.mxu0 0.0
        %396 = vmatpush1.msra.mxu0 0.0
        %397 = vmatprep.subr.mxu0 0.0
        %398 = vmatpush1.msra.mxu0 0.0
        %399 = vmatprep.subr.mxu0 0.0
        %400 = vmatpush1.msra.mxu0 0.0
        %401 = vmatprep.subr.mxu0 0.0
        %402 = vmatpush1.msra.mxu0 0.0
        %403 = vmatprep.subr.mxu0 0.0
        %404 = vmatpush1.msra.mxu0 0.0
        %405 = vmatprep.subr.mxu0 0.0
        %406 = vmatpush1.msra.mxu0 0.0
        %407 = vmatprep.subr.mxu0 0.0
        %408 = vmatpush1.msra.mxu0 0.0
        %409 = vmatprep.subr.mxu0 0.0
        %410 = vmatpush1.msra.mxu0 0.0
        %411 = vmatprep.subr.mxu0 0.0
        %412 = vmatpush1.msra.mxu0 0.0
        %413 = vmatprep.mubr.f32.mxu0 0.0
        %v414 = vand.u32 %v193, 4294901760
        %v415 = vsub.f32 %v193, %v414
        %416 = vmatmul.mubr.f32.gmra.mrb[0].mxu0 %v415
        %v417 = vpop.f32.mrb[0].mxu0
        %v418 = vadd.f32 %v344, %v417
        %v419 = vpop.f32.mrb[0].mxu0
        %420 = vdwg.mxu0
        %421 = vmatprep.subr.mxu0 0.0
        %v422 = vand.u32 %v189, 4294901760
        %423 = vmatpush1.msra.mxu0 %v422
        %424 = vmatprep.subr.mxu0 0.0
        %425 = vmatpush1.msra.mxu0 0.0
        %426 = vmatprep.subr.mxu0 0.0
        %427 = vmatpush1.msra.mxu0 0.0
        %428 = vmatprep.subr.mxu0 0.0
        %429 = vmatpush1.msra.mxu0 0.0
        %430 = vmatprep.subr.mxu0 0.0
        %431 = vmatpush1.msra.mxu0 0.0
        %432 = vmatprep.subr.mxu0 0.0
        %433 = vmatpush1.msra.mxu0 0.0
        %434 = vmatprep.subr.mxu0 0.0
        %435 = vmatpush1.msra.mxu0 0.0
        %436 = vmatprep.subr.mxu0 0.0
        %437 = vmatpush1.msra.mxu0 0.0
        %438 = vmatprep.subr.mxu0 0.0
        %439 = vmatpush1.msra.mxu0 0.0
        %440 = vmatprep.subr.mxu0 0.0
        %441 = vmatpush1.msra.mxu0 0.0
        %442 = vmatprep.subr.mxu0 0.0
        %443 = vmatpush1.msra.mxu0 0.0
        %444 = vmatprep.subr.mxu0 0.0
        %445 = vmatpush1.msra.mxu0 0.0
        %446 = vmatprep.subr.mxu0 0.0
        %447 = vmatpush1.msra.mxu0 0.0
        %448 = vmatprep.subr.mxu0 0.0
        %449 = vmatpush1.msra.mxu0 0.0
        %450 = vmatprep.subr.mxu0 0.0
        %451 = vmatpush1.msra.mxu0 0.0
        %452 = vmatprep.subr.mxu0 0.0
        %453 = vmatpush1.msra.mxu0 0.0
        %454 = vmatprep.subr.mxu0 0.0
        %455 = vmatpush1.msra.mxu0 0.0
        %456 = vmatprep.subr.mxu0 0.0
        %457 = vmatpush1.msra.mxu0 0.0
        %458 = vmatprep.subr.mxu0 0.0
        %459 = vmatpush1.msra.mxu0 0.0
        %460 = vmatprep.subr.mxu0 0.0
        %461 = vmatpush1.msra.mxu0 0.0
        %462 = vmatprep.subr.mxu0 0.0
        %463 = vmatpush1.msra.mxu0 0.0
        %464 = vmatprep.subr.mxu0 0.0
        %465 = vmatpush1.msra.mxu0 0.0
        %466 = vmatprep.subr.mxu0 0.0
        %467 = vmatpush1.msra.mxu0 0.0
        %468 = vmatprep.subr.mxu0 0.0
        %469 = vmatpush1.msra.mxu0 0.0
        %470 = vmatprep.subr.mxu0 0.0
        %471 = vmatpush1.msra.mxu0 0.0
        %472 = vmatprep.subr.mxu0 0.0
        %473 = vmatpush1.msra.mxu0 0.0
        %474 = vmatprep.subr.mxu0 0.0
        %475 = vmatpush1.msra.mxu0 0.0
        %476 = vmatprep.subr.mxu0 0.0
        %477 = vmatpush1.msra.mxu0 0.0
        %478 = vmatprep.subr.mxu0 0.0
        %479 = vmatpush1.msra.mxu0 0.0
        %480 = vmatprep.subr.mxu0 0.0
        %481 = vmatpush1.msra.mxu0 0.0
        %482 = vmatprep.subr.mxu0 0.0
        %483 = vmatpush1.msra.mxu0 0.0
        %484 = vmatprep.subr.mxu0 0.0
        %485 = vmatpush1.msra.mxu0 0.0
        %486 = vmatprep.mubr.f32.mxu0 0.0
        %v487 = vand.u32 %v193, 4294901760
        %v488 = vsub.f32 %v193, %v487
        %v489 = vand.u32 %v488, 4294901760
        %490 = vmatmul.mubr.f32.gmra.mrb[0].mxu0 %v489
        %v491 = vpop.f32.mrb[0].mxu0
        %v492 = vadd.f32 %v418, %v491
        %v493 = vpop.f32.mrb[0].mxu0
        %494 = vdwg.mxu0
        %495 = vmatprep.subr.mxu0 0.0
        %v496 = vand.u32 %v189, 4294901760
        %v497 = vsub.f32 %v189, %v496
        %v498 = vand.u32 %v497, 4294901760
        %499 = vmatpush1.msra.mxu0 %v498
        %500 = vmatprep.subr.mxu0 0.0
        %501 = vmatpush1.msra.mxu0 0.0
        %502 = vmatprep.subr.mxu0 0.0
        %503 = vmatpush1.msra.mxu0 0.0
        %504 = vmatprep.subr.mxu0 0.0
        %505 = vmatpush1.msra.mxu0 0.0
        %506 = vmatprep.subr.mxu0 0.0
        %507 = vmatpush1.msra.mxu0 0.0
        %508 = vmatprep.subr.mxu0 0.0
        %509 = vmatpush1.msra.mxu0 0.0
        %510 = vmatprep.subr.mxu0 0.0
        %511 = vmatpush1.msra.mxu0 0.0
        %512 = vmatprep.subr.mxu0 0.0
        %513 = vmatpush1.msra.mxu0 0.0
        %514 = vmatprep.subr.mxu0 0.0
        %515 = vmatpush1.msra.mxu0 0.0
        %516 = vmatprep.subr.mxu0 0.0
        %517 = vmatpush1.msra.mxu0 0.0
        %518 = vmatprep.subr.mxu0 0.0
        %519 = vmatpush1.msra.mxu0 0.0
        %520 = vmatprep.subr.mxu0 0.0
        %521 = vmatpush1.msra.mxu0 0.0
        %522 = vmatprep.subr.mxu0 0.0
        %523 = vmatpush1.msra.mxu0 0.0
        %524 = vmatprep.subr.mxu0 0.0
        %525 = vmatpush1.msra.mxu0 0.0
        %526 = vmatprep.subr.mxu0 0.0
        %527 = vmatpush1.msra.mxu0 0.0
        %528 = vmatprep.subr.mxu0 0.0
        %529 = vmatpush1.msra.mxu0 0.0
        %530 = vmatprep.subr.mxu0 0.0
        %531 = vmatpush1.msra.mxu0 0.0
        %532 = vmatprep.subr.mxu0 0.0
        %533 = vmatpush1.msra.mxu0 0.0
        %534 = vmatprep.subr.mxu0 0.0
        %535 = vmatpush1.msra.mxu0 0.0
        %536 = vmatprep.subr.mxu0 0.0
        %537 = vmatpush1.msra.mxu0 0.0
        %538 = vmatprep.subr.mxu0 0.0
        %539 = vmatpush1.msra.mxu0 0.0
        %540 = vmatprep.subr.mxu0 0.0
        %541 = vmatpush1.msra.mxu0 0.0
        %542 = vmatprep.subr.mxu0 0.0
        %543 = vmatpush1.msra.mxu0 0.0
        %544 = vmatprep.subr.mxu0 0.0
        %545 = vmatpush1.msra.mxu0 0.0
        %546 = vmatprep.subr.mxu0 0.0
        %547 = vmatpush1.msra.mxu0 0.0
        %548 = vmatprep.subr.mxu0 0.0
        %549 = vmatpush1.msra.mxu0 0.0
        %550 = vmatprep.subr.mxu0 0.0
        %551 = vmatpush1.msra.mxu0 0.0
        %552 = vmatprep.subr.mxu0 0.0
        %553 = vmatpush1.msra.mxu0 0.0
        %554 = vmatprep.subr.mxu0 0.0
        %555 = vmatpush1.msra.mxu0 0.0
        %556 = vmatprep.subr.mxu0 0.0
        %557 = vmatpush1.msra.mxu0 0.0
        %558 = vmatprep.subr.mxu0 0.0
        %559 = vmatpush1.msra.mxu0 0.0
        %560 = vmatprep.subr.mxu0 0.0
        %561 = vmatpush1.msra.mxu0 0.0
        %562 = vmatprep.mubr.f32.mxu0 0.0
        %v563 = vand.u32 %v193, 4294901760
        %564 = vmatmul.mubr.f32.gmra.mrb[0].mxu0 %v563
        %v565 = vpop.f32.mrb[0].mxu0
        %v566 = vadd.f32 %v492, %v565
        %v567 = vpop.f32.mrb[0].mxu0
        %568 = vdwg.mxu0
        %569 = vmatprep.subr.mxu0 0.0
        %v570 = vand.u32 %v189, 4294901760
        %571 = vmatpush1.msra.mxu0 %v570
        %572 = vmatprep.subr.mxu0 0.0
        %573 = vmatpush1.msra.mxu0 0.0
        %574 = vmatprep.subr.mxu0 0.0
        %575 = vmatpush1.msra.mxu0 0.0
        %576 = vmatprep.subr.mxu0 0.0
        %577 = vmatpush1.msra.mxu0 0.0
        %578 = vmatprep.subr.mxu0 0.0
        %579 = vmatpush1.msra.mxu0 0.0
        %580 = vmatprep.subr.mxu0 0.0
        %581 = vmatpush1.msra.mxu0 0.0
        %582 = vmatprep.subr.mxu0 0.0
        %583 = vmatpush1.msra.mxu0 0.0
        %584 = vmatprep.subr.mxu0 0.0
        %585 = vmatpush1.msra.mxu0 0.0
        %586 = vmatprep.subr.mxu0 0.0
        %587 = vmatpush1.msra.mxu0 0.0
        %588 = vmatprep.subr.mxu0 0.0
        %589 = vmatpush1.msra.mxu0 0.0
        %590 = vmatprep.subr.mxu0 0.0
        %591 = vmatpush1.msra.mxu0 0.0
        %592 = vmatprep.subr.mxu0 0.0
        %593 = vmatpush1.msra.mxu0 0.0
        %594 = vmatprep.subr.mxu0 0.0
        %595 = vmatpush1.msra.mxu0 0.0
        %596 = vmatprep.subr.mxu0 0.0
        %597 = vmatpush1.msra.mxu0 0.0
        %598 = vmatprep.subr.mxu0 0.0
        %599 = vmatpush1.msra.mxu0 0.0
        %600 = vmatprep.subr.mxu0 0.0
        %601 = vmatpush1.msra.mxu0 0.0
        %602 = vmatprep.subr.mxu0 0.0
        %603 = vmatpush1.msra.mxu0 0.0
        %604 = vmatprep.subr.mxu0 0.0
        %605 = vmatpush1.msra.mxu0 0.0
        %606 = vmatprep.subr.mxu0 0.0
        %607 = vmatpush1.msra.mxu0 0.0
        %608 = vmatprep.subr.mxu0 0.0
        %609 = vmatpush1.msra.mxu0 0.0
        %610 = vmatprep.subr.mxu0 0.0
        %611 = vmatpush1.msra.mxu0 0.0
        %612 = vmatprep.subr.mxu0 0.0
        %613 = vmatpush1.msra.mxu0 0.0
        %614 = vmatprep.subr.mxu0 0.0
        %615 = vmatpush1.msra.mxu0 0.0
        %616 = vmatprep.subr.mxu0 0.0
        %617 = vmatpush1.msra.mxu0 0.0
        %618 = vmatprep.subr.mxu0 0.0
        %619 = vmatpush1.msra.mxu0 0.0
        %620 = vmatprep.subr.mxu0 0.0
        %621 = vmatpush1.msra.mxu0 0.0
        %622 = vmatprep.subr.mxu0 0.0
        %623 = vmatpush1.msra.mxu0 0.0
        %624 = vmatprep.subr.mxu0 0.0
        %625 = vmatpush1.msra.mxu0 0.0
        %626 = vmatprep.subr.mxu0 0.0
        %627 = vmatpush1.msra.mxu0 0.0
        %628 = vmatprep.subr.mxu0 0.0
        %629 = vmatpush1.msra.mxu0 0.0
        %630 = vmatprep.subr.mxu0 0.0
        %631 = vmatpush1.msra.mxu0 0.0
        %632 = vmatprep.subr.mxu0 0.0
        %633 = vmatpush1.msra.mxu0 0.0
        %634 = vmatprep.mubr.f32.mxu0 0.0
        %v635 = vand.u32 %v193, 4294901760
        %636 = vmatmul.mubr.f32.gmra.mrb[0].mxu0 %v635
        %v637 = vpop.f32.mrb[0].mxu0
        %v638 = vadd.f32 %v566, %v637
        %v639 = vpop.f32.mrb[0].mxu0
        %640 = vdwg.mxu0
        %vm641 = vcmask 57344
        %v642 = vsel %vm641, %v190, 0.0
        %643 = vadd.xlane.f32.xlu0 %v642
        %v644 = vpop.xlane.xlu0 %643
        %v645 = vadd.f32 %v644, 1e-12
        %v646 = vrcp.pop %v645
        %v647 = vmul.f32 %v638, %v646
        %vm648 = vcmask 253952
        %649 = vst.msk [vmem:[%s185] sm:$0x1] %vm648, %v647
        %s650 = sand.u32 %s95, 1
        %s651 = scalar_lea.sflag [#allocation4], %s650
        %s652 = sand.u32 %s95, 1
        %s653 = scalar_lea.vmem [#allocation5], %s652
        // Predicated region
        $region33: #{tpu_custom_call.1} parent=27 // pred_check
          %p654 = pneg %p105
        $region34: #{tpu_custom_call.1} parent=27 // pred_check_branch
          %656 = sbr.rel (%p654) target = $region36
        $region35: #{tpu_custom_call.1} parent=27 // pred_region
          %s658 = ssub.s32 16, 16
          %659 = vsyncadd %s651, %s658
          %s660 = sadd.s32 %s24, %s23
          %s661 = smul.addr %s660, 16
          %s662 = scalar_lea.hbm %s2, %s661
          %s664 = sshll.u32 %s653, 4
          %s665 = int_to_ptr.vmem [resolvable:$true] %s664
          %667 = dma.vmem_to_hbm [thread:$0]  %s665, 16, %s662, %s651
        $region36: #{tpu_custom_call.1} parent=27 // pred_fallthru
          _
      $region28: #{tpu_custom_call.1} parent=5 // pred_fallthru
        _
      %p668 = scmp.le.s32.totalorder 2, %s14
      // Predicated region
      $region37: #{tpu_custom_call.1} parent=5 // pred_check
        %p669 = pneg %p668
      $region38: #{tpu_custom_call.1} parent=5 // pred_check_branch
        %671 = sbr.rel (%p669) target = $region40
      $region39: #{tpu_custom_call.1} parent=5 // pred_region
        %s672 = ssub.s32 %s14, 2
        // Predicated region
        $region41: #{tpu_custom_call.1} parent=39 // pred_check
          %p673 = pneg %p111
        $region42: #{tpu_custom_call.1} parent=39 // pred_check_branch
          %675 = sbr.rel (%p673) target = $region44
        $region43: #{tpu_custom_call.1} parent=39 // pred_region
          %s676 = sand.u32 %s96, 1
          %s677 = scalar_lea.sflag [#allocation4], %s676
          %s678 = sand.u32 %s96, 1
          %s679 = scalar_lea.vmem [#allocation5], %s678
          %680 = dma.done %s677, 16
        $region44: #{tpu_custom_call.1} parent=39 // pred_fallthru
          _
      $region40: #{tpu_custom_call.1} parent=5 // pred_fallthru
        _
    $region6: #{tpu_custom_call.1} parent=1 // loop_footer
      %s18 = sadd.s32 1, %s14
    $region7: #{tpu_custom_call.1} parent=1 // loop_footer_branch
      %13 = sbr.rel target = $region3
    $region8: #{tpu_custom_call.1} parent=1 // loop_exit
      _
    %681 = vsyncpa [#allocation3], 1
    %s682 = scalar_lea.sflag [#allocation3], 1
    %683 = vsyncpa %s682, 1
    %684 = vsyncpa [#allocation4], 1
    %s685 = scalar_lea.sflag [#allocation4], 1
    %686 = vsyncpa %s685, 1

</llo_original>
